<compile_context>
chip_gen: v7x
topology: tpu7x:2x2x1
jax: 0.10.0
libtpu: 0.0.40
codegen_flags: <defaults>
</compile_context>

<pallas_src>
import functools

import jax
import jax.numpy as jnp
from jax import lax
from jax.experimental import pallas as pl
from jax.experimental.pallas import tpu as pltpu

_EPS = 1e-5
_LANE = 128


# --------------------------------------------------------------------------- #
# helpers
# --------------------------------------------------------------------------- #
def _round_up(x, m):
    return ((x + m - 1) // m) * m


def _physical_vmem_bytes():
    try:
        return int(pltpu.get_tpu_info().vmem_capacity_bytes)
    except Exception:
        return 64 * 1024 * 1024  # conservative fallback (v7x per-TensorCore)


def _pick_tile_d(d_pad, cap):
    """Largest multiple-of-128 divisor of d_pad that is <= cap (>= 128)."""
    cap = max(_LANE, (cap // _LANE) * _LANE)
    best = _LANE
    t = _LANE
    while t <= min(d_pad, cap):
        if d_pad % t == 0:
            best = t
        t += _LANE
    return best


def _maybe_buffered(block_shape, index_map, depth=3):
    """3-deep pipelined BlockSpec for pure-streaming inputs (fallback: default)."""
    try:
        return pl.BlockSpec(block_shape, index_map, pipeline_mode=pl.Buffered(depth))
    except Exception:
        return pl.BlockSpec(block_shape, index_map)


# --------------------------------------------------------------------------- #
# kernels
# --------------------------------------------------------------------------- #
def _bn_resident_kernel(x_ref, g_ref, b_ref, o_ref, *, inv_n):
    """Single pass: whole N axis resident, one feature slab per grid step."""
    x = x_ref[...].astype(jnp.float32)
    mean = jnp.sum(x, axis=0, keepdims=True) * jnp.float32(inv_n)
    xc = x - mean                                            # reused below
    var = jnp.sum(xc * xc, axis=0, keepdims=True) * jnp.float32(inv_n)
    scale = lax.rsqrt(var + _EPS) * g_ref[...]               # fold gamma (EUP rsqrt)
    o_ref[...] = (xc * scale + b_ref[...]).astype(o_ref.dtype)  # 2 VPU ops/elem


def _bn_stats_kernel(x_ref, g_ref, b_ref, scale_ref, shift_ref, sum_ref, sq_ref,
                     *, n_true, tile_n, need_mask):
    """Pass 1: accumulate per-feature sum / sum-of-squares across N tiles."""
    nj = pl.program_id(1)

    @pl.when(nj == 0)
    def _init():
        sum_ref[...] = jnp.zeros_like(sum_ref)
        sq_ref[...] = jnp.zeros_like(sq_ref)

    x = x_ref[...].astype(jnp.float32)
    if need_mask:  # last N tile extends past n_true -> zero the padded rows
        row = nj * tile_n + lax.broadcasted_iota(jnp.int32, x.shape, 0)
        x = jnp.where(row < n_true, x, 0.0)
    sum_ref[...] += jnp.sum(x, axis=0, keepdims=True)
    sq_ref[...] += jnp.sum(x * x, axis=0, keepdims=True)

    @pl.when(nj == pl.num_programs(1) - 1)
    def _finalize():
        inv_n = jnp.float32(1.0 / n_true)
        mean = sum_ref[...] * inv_n
        var = jnp.maximum(sq_ref[...] * inv_n - mean * mean, 0.0)
        scale = lax.rsqrt(var + _EPS) * g_ref[...]
        scale_ref[...] = scale
        shift_ref[...] = b_ref[...] - mean * scale


def _bn_apply_kernel(x_ref, scale_ref, shift_ref, o_ref):
    """Pass 2: streaming y = x * scale + shift."""
    x = x_ref[...].astype(jnp.float32)
    o_ref[...] = (x * scale_ref[...] + shift_ref[...]).astype(o_ref.dtype)


# --------------------------------------------------------------------------- #
# wrapper
# --------------------------------------------------------------------------- #
@functools.partial(jax.jit, static_argnames=("tile_n", "tile_d_cap",
                                             "force_two_pass"))
def gnn_norm_bn(tensor, gamma, beta, *, tile_n=1024, tile_d_cap=512,
                force_two_pass=False):
    """GNN_Norm(norm_type='bn') forward.  tensor: [N, D] node features."""
    n, d = tensor.shape
    out_dtype = tensor.dtype

    # Pad the feature dim to a lane multiple (handles embed_dim=300 etc.).
    d_pad = _round_up(d, _LANE)
    if d_pad != d:
        tensor = jnp.pad(tensor, ((0, 0), (0, d_pad - d)))
        gamma = jnp.pad(gamma, (0, d_pad - d), constant_values=1.0)
        beta = jnp.pad(beta, (0, d_pad - d), constant_values=0.0)
    gamma2 = gamma.reshape(1, d_pad).astype(jnp.float32)
    beta2 = beta.reshape(1, d_pad).astype(jnp.float32)

    tile_d = _pick_tile_d(d_pad, tile_d_cap)
    itemsize = tensor.dtype.itemsize

    # Per-generation VMEM budget (128 MiB v5e/v6e, 64 MiB per-TC v7x).
    phys = _physical_vmem_bytes()
    vmem_limit = min(int(phys * 0.75), 100 * 1024 * 1024)
    budget = int(vmem_limit * 0.8)  # headroom for compiler scratch / spills

    # Resident path: double-buffered in + out slabs plus f32 temporaries.
    resident_bytes = n * tile_d * (4 * itemsize + 8) + 8 * tile_d * 4
    use_resident = (not force_two_pass) and (resident_bytes <= budget)

    def _params(sem):
        return pltpu.CompilerParams(dimension_semantics=sem,
                                    vmem_limit_bytes=vmem_limit)

    if use_resident:
        out = pl.pallas_call(
            functools.partial(_bn_resident_kernel, inv_n=1.0 / n),
            out_shape=jax.ShapeDtypeStruct((n, d_pad), out_dtype),
            grid_spec=pltpu.PrefetchScalarGridSpec(
                num_scalar_prefetch=0,
                grid=(d_pad // tile_d,),
                in_specs=[pl.BlockSpec((n, tile_d), lambda j: (0, j)),
                          pl.BlockSpec((1, tile_d), lambda j: (0, j)),
                          pl.BlockSpec((1, tile_d), lambda j: (0, j))],
                out_specs=pl.BlockSpec((n, tile_d), lambda j: (0, j)),
            ),
            compiler_params=_params(("parallel",)),
        )(tensor, gamma2, beta2)
    else:
        # ------------------ two-pass: stats then streaming normalize ----------
        tile_n_eff = max(8, (min(tile_n, _round_up(n, 8)) // 8) * 8)
        max_tile_n = max(8, (budget // (6 * tile_d * itemsize) // 8) * 8)
        tile_n_eff = min(tile_n_eff, max_tile_n)
        n_tiles = (n + tile_n_eff - 1) // tile_n_eff
        need_mask = (n % tile_n_eff) != 0

        scale, shift = pl.pallas_call(
            functools.partial(_bn_stats_kernel, n_true=n, tile_n=tile_n_eff,
                              need_mask=need_mask),
            out_shape=(jax.ShapeDtypeStruct((1, d_pad), jnp.float32),
                       jax.ShapeDtypeStruct((1, d_pad), jnp.float32)),
            grid_spec=pltpu.PrefetchScalarGridSpec(
                num_scalar_prefetch=0,
                grid=(d_pad // tile_d, n_tiles),
                in_specs=[pl.BlockSpec((tile_n_eff, tile_d),
                                       lambda dj, nj: (nj, dj)),
                          pl.BlockSpec((1, tile_d), lambda dj, nj: (0, dj)),
                          pl.BlockSpec((1, tile_d), lambda dj, nj: (0, dj))],
                out_specs=[pl.BlockSpec((1, tile_d), lambda dj, nj: (0, dj)),
                           pl.BlockSpec((1, tile_d), lambda dj, nj: (0, dj))],
                scratch_shapes=[pltpu.VMEM((1, tile_d), jnp.float32),
                                pltpu.VMEM((1, tile_d), jnp.float32)],
            ),
            compiler_params=_params(("parallel", "arbitrary")),
        )(tensor, gamma2, beta2)

        out = pl.pallas_call(
            _bn_apply_kernel,
            out_shape=jax.ShapeDtypeStruct((n, d_pad), out_dtype),
            grid_spec=pltpu.PrefetchScalarGridSpec(
                num_scalar_prefetch=0,
                grid=(d_pad // tile_d, n_tiles),
                in_specs=[_maybe_buffered((tile_n_eff, tile_d),
                                          lambda dj, nj: (nj, dj)),
                          pl.BlockSpec((1, tile_d), lambda dj, nj: (0, dj)),
                          pl.BlockSpec((1, tile_d), lambda dj, nj: (0, dj))],
                out_specs=pl.BlockSpec((tile_n_eff, tile_d),
                                       lambda dj, nj: (nj, dj)),
            ),
            compiler_params=_params(("parallel", "parallel")),
        )(tensor, scale, shift)

    if d_pad != d:
        out = out[:, :d]
    return out


def gnn_norm_forward(graphs, tensor, gamma, beta, norm_type="bn", **kwargs):
    """GNN_Norm.forward.  The 'bn' branch (LocalBN1d) ignores `graphs`."""
    if norm_type == "None":
        return tensor
    if norm_type == "bn":
        return gnn_norm_bn(tensor, gamma, beta, **kwargs)
    # TODO(synk): 'gn'/'in'/'xn'..'xn10' branches not implemented (no source).
    raise NotImplementedError(f"norm_type={norm_type!r} not implemented")


# --------------------------------------------------------------------------- #
# pure-JAX reference
# --------------------------------------------------------------------------- #
def gnn_norm_bn_ref(tensor, gamma, beta):
    x = tensor.astype(jnp.float32)
    mean = jnp.mean(x, axis=0, keepdims=True)
    var = jnp.mean((x - mean) ** 2, axis=0, keepdims=True)
    y = (x - mean) / jnp.sqrt(var + _EPS)
    return (y * gamma[None, :] + beta[None, :]).astype(tensor.dtype)


if __name__ == "__main__":
    key = jax.random.PRNGKey(0)
    k1, k2, k3, k4 = jax.random.split(key, 4)

    # Case 1: module-default embed_dim=300 (exercises lane padding), small node
    # count -> resident single-pass path.
    N, D = 64, 300
    x = jax.random.normal(k1, (N, D), dtype=jnp.float32) * 2.0 + 0.5
    gamma = 1.0 + 0.1 * jax.random.normal(k2, (D,), dtype=jnp.float32)
    beta = 0.1 * jax.random.normal(k3, (D,), dtype=jnp.float32)

    graphs = None  # unused by the 'bn' branch, exactly as in LocalBN1d
    out1 = gnn_norm_forward(graphs, x, gamma, beta)
    out1 = jax.block_until_ready(out1)
    ref1 = gnn_norm_bn_ref(x, gamma, beta)
    assert out1.shape == x.shape
    assert jnp.allclose(out1, ref1, atol=1e-4, rtol=1e-4), "resident path mismatch"

    # Case 2: force the tiled two-pass path (N tiling, partial-tile masking,
    # streaming normalize) on a small shape.
    N2, D2 = 200, 300
    x2 = jax.random.normal(k4, (N2, D2), dtype=jnp.float32) * 1.5 - 0.3
    out2 = gnn_norm_forward(graphs, x2, gamma, beta,
                            force_two_pass=True, tile_n=64)
    out2 = jax.block_until_ready(out2)
    ref2 = gnn_norm_bn_ref(x2, gamma, beta)
    assert out2.shape == x2.shape
    assert jnp.allclose(out2, ref2, atol=1e-4, rtol=1e-4), "two-pass path mismatch"

    print("KERNEL_OK")
</pallas_src>

<mosaic_0001>
module attributes {stable_mosaic.version = 11 : i64} {
  func.func @_bn_resident_kernel(%arg0: i32, %arg1: memref<64x384xf32, #tpu.memory_space<vmem>>, %arg2: memref<1x384xf32, #tpu.memory_space<vmem>>, %arg3: memref<1x384xf32, #tpu.memory_space<vmem>>, %arg4: memref<64x384xf32, #tpu.memory_space<vmem>>) attributes {dimension_semantics = [#tpu.dimension_semantics<parallel>], iteration_bounds = array<i64: 1>, scalar_prefetch = 0 : i64, scratch_operands = 0 : i64, tpu.core_type = #tpu.core_type<tc>, window_params = [{transform_indices = @transform_0, window_bounds = array<i64: 64, 384>}, {transform_indices = @transform_1, window_bounds = array<i64: 1, 384>}, {transform_indices = @transform_2, window_bounds = array<i64: 1, 384>}, {transform_indices = @transform_3, window_bounds = array<i64: 64, 384>}]} {
    %c0 = arith.constant 0 : index
    %c0_0 = arith.constant 0 : index
    %0 = vector.load %arg1[%c0, %c0_0] : memref<64x384xf32, #tpu.memory_space<vmem>>, vector<64x384xf32>
    %cst = arith.constant dense<0.000000e+00> : vector<384xf32>
    %1 = vector.multi_reduction <add>, %0, %cst [0] : vector<64x384xf32> to vector<384xf32>
    %2 = vector.shape_cast %1 : vector<384xf32> to vector<1x384xf32>
    %cst_1 = arith.constant 1.562500e-02 : f32
    %3 = vector.broadcast %cst_1 : f32 to vector<1x384xf32>
    %4 = arith.mulf %2, %3 : vector<1x384xf32>
    %5 = vector.broadcast %4 : vector<1x384xf32> to vector<64x384xf32>
    %6 = arith.subf %0, %5 : vector<64x384xf32>
    %7 = arith.mulf %6, %6 : vector<64x384xf32>
    %cst_2 = arith.constant dense<0.000000e+00> : vector<384xf32>
    %8 = vector.multi_reduction <add>, %7, %cst_2 [0] : vector<64x384xf32> to vector<384xf32>
    %9 = vector.shape_cast %8 : vector<384xf32> to vector<1x384xf32>
    %cst_3 = arith.constant 1.562500e-02 : f32
    %10 = vector.broadcast %cst_3 : f32 to vector<1x384xf32>
    %11 = arith.mulf %9, %10 : vector<1x384xf32>
    %cst_4 = arith.constant 9.99999974E-6 : f32
    %12 = vector.broadcast %cst_4 : f32 to vector<1x384xf32>
    %13 = arith.addf %11, %12 : vector<1x384xf32>
    %14 = math.rsqrt %13 : vector<1x384xf32>
    %c0_5 = arith.constant 0 : index
    %c0_6 = arith.constant 0 : index
    %15 = vector.load %arg2[%c0_5, %c0_6] : memref<1x384xf32, #tpu.memory_space<vmem>>, vector<1x384xf32>
    %16 = arith.mulf %14, %15 : vector<1x384xf32>
    %17 = vector.broadcast %16 : vector<1x384xf32> to vector<64x384xf32>
    %18 = arith.mulf %6, %17 : vector<64x384xf32>
    %c0_7 = arith.constant 0 : index
    %c0_8 = arith.constant 0 : index
    %19 = vector.load %arg3[%c0_7, %c0_8] : memref<1x384xf32, #tpu.memory_space<vmem>>, vector<1x384xf32>
    %20 = vector.broadcast %19 : vector<1x384xf32> to vector<64x384xf32>
    %21 = arith.addf %18, %20 : vector<64x384xf32>
    %c0_9 = arith.constant 0 : index
    %c0_10 = arith.constant 0 : index
    %22 = vector.load %arg4[%c0_9, %c0_10] : memref<64x384xf32, #tpu.memory_space<vmem>>, vector<64x384xf32>
    tpu.vector_store %arg4[%c0_9, %c0_10], %21 {strides = array<i32>} : memref<64x384xf32, #tpu.memory_space<vmem>>, vector<64x384xf32>,
    return
  }
  func.func @transform_0(%arg0: i32) -> (i32, i32) {
    %c0_i32 = arith.constant 0 : i32
    %c0_i32_0 = arith.constant 0 : i32
    return %c0_i32, %arg0 : i32, i32
  }
  func.func @transform_1(%arg0: i32) -> (i32, i32) {
    %c0_i32 = arith.constant 0 : i32
    %c0_i32_0 = arith.constant 0 : i32
    return %c0_i32, %arg0 : i32, i32
  }
  func.func @transform_2(%arg0: i32) -> (i32, i32) {
    %c0_i32 = arith.constant 0 : i32
    %c0_i32_0 = arith.constant 0 : i32
    return %c0_i32, %arg0 : i32, i32
  }
  func.func @transform_3(%arg0: i32) -> (i32, i32) {
    %c0_i32 = arith.constant 0 : i32
    %c0_i32_0 = arith.constant 0 : i32
    return %c0_i32, %arg0 : i32, i32
  }
}

</mosaic_0001>

<llo_original>
// kernel: gnn_norm_bn.1
$region0: #{gnn_norm_bn.1}
  #allocation0 [shape = 'u32[]', space=smem, size = 0x4, offset = 0x4, fixed_abs, tag = 'smem constant byte address 0x4 - core index']
  #allocation1 [shape = 'u32[144,128]{1,0:T(1,128)}', space=vmem, size = 0x12000, scoped, tag = 'internal scratch']
  %s0 = inlined_call_operand.vmem [shape: f32[64,384], index: 0, kind: input, shape index: {}]
  %s1 = inlined_call_operand.vmem [shape: f32[1,384], index: 1, kind: input, shape index: {}]
  %s2 = inlined_call_operand.vmem [shape: f32[1,384], index: 2, kind: input, shape index: {}]
  %s3 = inlined_call_operand.hbm [shape: f32[64,384], index: 3, kind: output, shape index: {}]
  %s4 = sld [smem:[#allocation0]]
  $region22: #{gnn_norm_bn.1} parent=0
    _
  %s6 = ssub.s32 1, %s4
  %s7 = scalar_select 0, %s6, %s4
  $region1: #{gnn_norm_bn.1} parent=0
    #allocation2 [shape = 'u8[98304]{0}', space=vmem, size = 0x18000, scoped, tag = 'output window, operand 0, single buffered']
    #allocation3 [shape = 's32[1]{0}', space=sflag, size = 0x4, scoped, tag = 'scoped memory for gnn_norm_bn.1']
    %8 = vsyncpa [#allocation3], 0
    // Predicated region
    $region2: #{gnn_norm_bn.1} parent=1 // pred_check
      _
    $region3: #{gnn_norm_bn.1} parent=1 // pred_check_branch
      %10 = sbr.rel (0) target = $region5
    $region4: #{gnn_norm_bn.1} parent=1 // pred_region
      _
    $region5: #{gnn_norm_bn.1} parent=1 // pred_fallthru
      _
    // Predicated region
    $region6: #{gnn_norm_bn.1} parent=1 // pred_check
      _
    $region7: #{gnn_norm_bn.1} parent=1 // pred_check_branch
      %12 = sbr.rel (0) target = $region9
    $region8: #{gnn_norm_bn.1} parent=1 // pred_region
      _
    $region9: #{gnn_norm_bn.1} parent=1 // pred_fallthru
      _
    // Predicated region
    $region10: #{gnn_norm_bn.1} parent=1 // pred_check
      _
    $region11: #{gnn_norm_bn.1} parent=1 // pred_check_branch
      %14 = sbr.rel (0) target = $region13
    $region12: #{gnn_norm_bn.1} parent=1 // pred_region
      _
    $region13: #{gnn_norm_bn.1} parent=1 // pred_fallthru
      _
    %v15 = vld [vmem:[%s0] sm:$0xff]
    %v16 = vld [vmem:[%s0 + $0x8] sm:$0xff]
    %v17 = vld [vmem:[%s0 + $0x10] sm:$0xff]
    %v18 = vld [vmem:[%s0 + $0x18] sm:$0xff]
    %v19 = vld [vmem:[%s0 + $0x20] sm:$0xff]
    %v20 = vld [vmem:[%s0 + $0x28] sm:$0xff]
    %v21 = vld [vmem:[%s0 + $0x30] sm:$0xff]
    %v22 = vld [vmem:[%s0 + $0x38] sm:$0xff]
    %v23 = vld [vmem:[%s0 + $0x40] sm:$0xff]
    %v24 = vld [vmem:[%s0 + $0x48] sm:$0xff]
    %v25 = vld [vmem:[%s0 + $0x50] sm:$0xff]
    %v26 = vld [vmem:[%s0 + $0x58] sm:$0xff]
    %v27 = vld [vmem:[%s0 + $0x60] sm:$0xff]
    %v28 = vld [vmem:[%s0 + $0x68] sm:$0xff]
    %v29 = vld [vmem:[%s0 + $0x70] sm:$0xff]
    %v30 = vld [vmem:[%s0 + $0x78] sm:$0xff]
    %v31 = vld [vmem:[%s0 + $0x80] sm:$0xff]
    %v32 = vld [vmem:[%s0 + $0x88] sm:$0xff]
    %v33 = vld [vmem:[%s0 + $0x90] sm:$0xff]
    %v34 = vld [vmem:[%s0 + $0x98] sm:$0xff]
    %v35 = vld [vmem:[%s0 + $0xa0] sm:$0xff]
    %v36 = vld [vmem:[%s0 + $0xa8] sm:$0xff]
    %v37 = vld [vmem:[%s0 + $0xb0] sm:$0xff]
    %v38 = vld [vmem:[%s0 + $0xb8] sm:$0xff]
    %v39 = vadd.f32 %v15, %v18
    %v40 = vadd.f32 %v39, %v21
    %v41 = vadd.f32 %v40, %v24
    %v42 = vadd.f32 %v41, %v27
    %v43 = vadd.f32 %v42, %v30
    %v44 = vadd.f32 %v43, %v33
    %v45 = vadd.f32 %v44, %v36
    %v46 = vrot.slane %v45, 4
    %v47 = vadd.f32 %v45, %v46
    %v48 = vrot.slane %v47, 2
    %v49 = vadd.f32 %v47, %v48
    %v50 = vrot.slane %v49, 1
    %v51 = vadd.f32 %v49, %v50
    %v52 = vadd.f32 %v16, %v19
    %v53 = vadd.f32 %v52, %v22
    %v54 = vadd.f32 %v53, %v25
    %v55 = vadd.f32 %v54, %v28
    %v56 = vadd.f32 %v55, %v31
    %v57 = vadd.f32 %v56, %v34
    %v58 = vadd.f32 %v57, %v37
    %v59 = vrot.slane %v58, 4
    %v60 = vadd.f32 %v58, %v59
    %v61 = vrot.slane %v60, 2
    %v62 = vadd.f32 %v60, %v61
    %v63 = vrot.slane %v62, 1
    %v64 = vadd.f32 %v62, %v63
    %v65 = vadd.f32 %v17, %v20
    %v66 = vadd.f32 %v65, %v23
    %v67 = vadd.f32 %v66, %v26
    %v68 = vadd.f32 %v67, %v29
    %v69 = vadd.f32 %v68, %v32
    %v70 = vadd.f32 %v69, %v35
    %v71 = vadd.f32 %v70, %v38
    %v72 = vrot.slane %v71, 4
    %v73 = vadd.f32 %v71, %v72
    %v74 = vrot.slane %v73, 2
    %v75 = vadd.f32 %v73, %v74
    %v76 = vrot.slane %v75, 1
    %v77 = vadd.f32 %v75, %v76
    %v78 = vmul.f32 %v51, 0.015625
    %v79 = vmul.f32 %v64, 0.015625
    %v80 = vmul.f32 %v77, 0.015625
    %v81 = vsub.f32 %v15, %v78
    %v82 = vsub.f32 %v16, %v79
    %v83 = vsub.f32 %v17, %v80
    %v84 = vsub.f32 %v18, %v78
    %v85 = vsub.f32 %v19, %v79
    %v86 = vsub.f32 %v20, %v80
    %v87 = vsub.f32 %v21, %v78
    %v88 = vsub.f32 %v22, %v79
    %v89 = vsub.f32 %v23, %v80
    %v90 = vsub.f32 %v24, %v78
    %v91 = vsub.f32 %v25, %v79
    %v92 = vsub.f32 %v26, %v80
    %v93 = vsub.f32 %v27, %v78
    %v94 = vsub.f32 %v28, %v79
    %v95 = vsub.f32 %v29, %v80
    %v96 = vsub.f32 %v30, %v78
    %v97 = vsub.f32 %v31, %v79
    %v98 = vsub.f32 %v32, %v80
    %v99 = vsub.f32 %v33, %v78
    %v100 = vsub.f32 %v34, %v79
    %v101 = vsub.f32 %v35, %v80
    %v102 = vsub.f32 %v36, %v78
    %v103 = vsub.f32 %v37, %v79
    %v104 = vsub.f32 %v38, %v80
    %v105 = vmul.f32 %v81, %v81
    %v106 = vmul.f32 %v82, %v82
    %v107 = vmul.f32 %v83, %v83
    %v108 = vmul.f32 %v84, %v84
    %v109 = vmul.f32 %v85, %v85
    %v110 = vmul.f32 %v86, %v86
    %v111 = vmul.f32 %v87, %v87
    %v112 = vmul.f32 %v88, %v88
    %v113 = vmul.f32 %v89, %v89
    %v114 = vmul.f32 %v90, %v90
    %v115 = vmul.f32 %v91, %v91
    %v116 = vmul.f32 %v92, %v92
    %v117 = vmul.f32 %v93, %v93
    %v118 = vmul.f32 %v94, %v94
    %v119 = vmul.f32 %v95, %v95
    %v120 = vmul.f32 %v96, %v96
    %v121 = vmul.f32 %v97, %v97
    %v122 = vmul.f32 %v98, %v98
    %v123 = vmul.f32 %v99, %v99
    %v124 = vmul.f32 %v100, %v100
    %v125 = vmul.f32 %v101, %v101
    %v126 = vmul.f32 %v102, %v102
    %v127 = vmul.f32 %v103, %v103
    %v128 = vmul.f32 %v104, %v104
    %v129 = vadd.f32 %v105, %v108
    %v130 = vadd.f32 %v129, %v111
    %v131 = vadd.f32 %v130, %v114
    %v132 = vadd.f32 %v131, %v117
    %v133 = vadd.f32 %v132, %v120
    %v134 = vadd.f32 %v133, %v123
    %v135 = vadd.f32 %v134, %v126
    %v136 = vrot.slane %v135, 4
    %v137 = vadd.f32 %v135, %v136
    %v138 = vrot.slane %v137, 2
    %v139 = vadd.f32 %v137, %v138
    %v140 = vrot.slane %v139, 1
    %v141 = vadd.f32 %v139, %v140
    %v142 = vadd.f32 %v106, %v109
    %v143 = vadd.f32 %v142, %v112
    %v144 = vadd.f32 %v143, %v115
    %v145 = vadd.f32 %v144, %v118
    %v146 = vadd.f32 %v145, %v121
    %v147 = vadd.f32 %v146, %v124
    %v148 = vadd.f32 %v147, %v127
    %v149 = vrot.slane %v148, 4
    %v150 = vadd.f32 %v148, %v149
    %v151 = vrot.slane %v150, 2
    %v152 = vadd.f32 %v150, %v151
    %v153 = vrot.slane %v152, 1
    %v154 = vadd.f32 %v152, %v153
    %v155 = vadd.f32 %v107, %v110
    %v156 = vadd.f32 %v155, %v113
    %v157 = vadd.f32 %v156, %v116
    %v158 = vadd.f32 %v157, %v119
    %v159 = vadd.f32 %v158, %v122
    %v160 = vadd.f32 %v159, %v125
    %v161 = vadd.f32 %v160, %v128
    %v162 = vrot.slane %v161, 4
    %v163 = vadd.f32 %v161, %v162
    %v164 = vrot.slane %v163, 2
    %v165 = vadd.f32 %v163, %v164
    %v166 = vrot.slane %v165, 1
    %v167 = vadd.f32 %v165, %v166
    %v168 = vmul.f32 %v141, 0.015625
    %v169 = vmul.f32 %v154, 0.015625
    %v170 = vmul.f32 %v167, 0.015625
    %v171 = vadd.f32 %v168, 1e-05
    %v172 = vadd.f32 %v169, 1e-05
    %v173 = vadd.f32 %v170, 1e-05
    %v174 = vrsqrt.pop %v171
    %v175 = vrsqrt.pop %v172
    %v176 = vrsqrt.pop %v173
    %v177 = vld [vmem:[%s1] sm:$0x7]
    %v179 = vlaneseq
    %v180 = vshrl.u32 %v179, 7
    %v181 = vsub.s32 0, %v180
    %v182 = vrot.slane %v177, %v181
    %v183 = vlaneseq
    %v184 = vshrl.u32 %v183, 7
    %v185 = vsub.s32 1, %v184
    %v186 = vrot.slane %v177, %v185
    %v187 = vlaneseq
    %v188 = vshrl.u32 %v187, 7
    %v189 = vsub.s32 2, %v188
    %v190 = vrot.slane %v177, %v189
    %v194 = vmul.f32 %v174, %v182
    %v195 = vmul.f32 %v175, %v186
    %v196 = vmul.f32 %v176, %v190
    %v197 = vlaneseq
    %v198 = vshrl.u32 %v197, 7
    %v199 = vsub.s32 0, %v198
    %v200 = vrot.slane %v194, %v199
    %v201 = vlaneseq
    %v202 = vshrl.u32 %v201, 7
    %v203 = vsub.s32 0, %v202
    %v204 = vrot.slane %v195, %v203
    %v205 = vlaneseq
    %v206 = vshrl.u32 %v205, 7
    %v207 = vsub.s32 0, %v206
    %v208 = vrot.slane %v196, %v207
    %v209 = vmul.f32 %v81, %v200
    %v210 = vmul.f32 %v82, %v204
    %v211 = vmul.f32 %v83, %v208
    %v212 = vmul.f32 %v84, %v200
    %v213 = vmul.f32 %v85, %v204
    %v214 = vmul.f32 %v86, %v208
    %v215 = vmul.f32 %v87, %v200
    %v216 = vmul.f32 %v88, %v204
    %v217 = vmul.f32 %v89, %v208
    %v218 = vmul.f32 %v90, %v200
    %v219 = vmul.f32 %v91, %v204
    %v220 = vmul.f32 %v92, %v208
    %v221 = vmul.f32 %v93, %v200
    %v222 = vmul.f32 %v94, %v204
    %v223 = vmul.f32 %v95, %v208
    %v224 = vmul.f32 %v96, %v200
    %v225 = vmul.f32 %v97, %v204
    %v226 = vmul.f32 %v98, %v208
    %v227 = vmul.f32 %v99, %v200
    %v228 = vmul.f32 %v100, %v204
    %v229 = vmul.f32 %v101, %v208
    %v230 = vmul.f32 %v102, %v200
    %v231 = vmul.f32 %v103, %v204
    %v232 = vmul.f32 %v104, %v208
    %v233 = vld [vmem:[%s2] sm:$0x7]
    %v235 = vlaneseq
    %v236 = vshrl.u32 %v235, 7
    %v237 = vsub.s32 0, %v236
    %v238 = vrot.slane %v233, %v237
    %v239 = vlaneseq
    %v240 = vshrl.u32 %v239, 7
    %v241 = vsub.s32 1, %v240
    %v242 = vrot.slane %v233, %v241
    %v243 = vlaneseq
    %v244 = vshrl.u32 %v243, 7
    %v245 = vsub.s32 2, %v244
    %v246 = vrot.slane %v233, %v245
    %v250 = vadd.f32 %v209, %v238
    %v251 = vadd.f32 %v210, %v242
    %v252 = vadd.f32 %v211, %v246
    %v253 = vadd.f32 %v212, %v238
    %v254 = vadd.f32 %v213, %v242
    %v255 = vadd.f32 %v214, %v246
    %v256 = vadd.f32 %v215, %v238
    %v257 = vadd.f32 %v216, %v242
    %v258 = vadd.f32 %v217, %v246
    %v259 = vadd.f32 %v218, %v238
    %v260 = vadd.f32 %v219, %v242
    %v261 = vadd.f32 %v220, %v246
    %v262 = vadd.f32 %v221, %v238
    %v263 = vadd.f32 %v222, %v242
    %v264 = vadd.f32 %v223, %v246
    %v265 = vadd.f32 %v224, %v238
    %v266 = vadd.f32 %v225, %v242
    %v267 = vadd.f32 %v226, %v246
    %v268 = vadd.f32 %v227, %v238
    %v269 = vadd.f32 %v228, %v242
    %v270 = vadd.f32 %v229, %v246
    %v271 = vadd.f32 %v230, %v238
    %v272 = vadd.f32 %v231, %v242
    %v273 = vadd.f32 %v232, %v246
    %274 = vst [vmem:[#allocation2] sm:$0xff] %v250
    %275 = vst [vmem:[#allocation2 + $0x8] sm:$0xff] %v251
    %276 = vst [vmem:[#allocation2 + $0x10] sm:$0xff] %v252
    %277 = vst [vmem:[#allocation2 + $0x18] sm:$0xff] %v253
    %278 = vst [vmem:[#allocation2 + $0x20] sm:$0xff] %v254
    %279 = vst [vmem:[#allocation2 + $0x28] sm:$0xff] %v255
    %280 = vst [vmem:[#allocation2 + $0x30] sm:$0xff] %v256
    %281 = vst [vmem:[#allocation2 + $0x38] sm:$0xff] %v257
    %282 = vst [vmem:[#allocation2 + $0x40] sm:$0xff] %v258
    %283 = vst [vmem:[#allocation2 + $0x48] sm:$0xff] %v259
    %284 = vst [vmem:[#allocation2 + $0x50] sm:$0xff] %v260
    %285 = vst [vmem:[#allocation2 + $0x58] sm:$0xff] %v261
    %286 = vst [vmem:[#allocation2 + $0x60] sm:$0xff] %v262
    %287 = vst [vmem:[#allocation2 + $0x68] sm:$0xff] %v263
    %288 = vst [vmem:[#allocation2 + $0x70] sm:$0xff] %v264
    %289 = vst [vmem:[#allocation2 + $0x78] sm:$0xff] %v265
    %290 = vst [vmem:[#allocation2 + $0x80] sm:$0xff] %v266
    %291 = vst [vmem:[#allocation2 + $0x88] sm:$0xff] %v267
    %292 = vst [vmem:[#allocation2 + $0x90] sm:$0xff] %v268
    %293 = vst [vmem:[#allocation2 + $0x98] sm:$0xff] %v269
    %294 = vst [vmem:[#allocation2 + $0xa0] sm:$0xff] %v270
    %295 = vst [vmem:[#allocation2 + $0xa8] sm:$0xff] %v271
    %296 = vst [vmem:[#allocation2 + $0xb0] sm:$0xff] %v272
    %297 = vst [vmem:[#allocation2 + $0xb8] sm:$0xff] %v273
    // Predicated region
    $region14: #{gnn_norm_bn.1} parent=1 // pred_check
      _
    $region15: #{gnn_norm_bn.1} parent=1 // pred_check_branch
      %299 = sbr.rel (0) target = $region17
    $region16: #{gnn_norm_bn.1} parent=1 // pred_region
      %s301 = ssub.s32 3072, 3072
      %302 = vsyncadd [#allocation3], %s301
      %s303 = sshll.u32 [#allocation2], 4
      %s304 = int_to_ptr.vmem [resolvable:$true] %s303
      %309 = dma.vmem_to_hbm [thread:$0]  %s304, 3072, %s3, [#allocation3], 384, 384, 24
    $region17: #{gnn_norm_bn.1} parent=1 // pred_fallthru
      _
    // Predicated region
    $region18: #{gnn_norm_bn.1} parent=1 // pred_check
      _
    $region19: #{gnn_norm_bn.1} parent=1 // pred_check_branch
      %311 = sbr.rel (0) target = $region21
    $region20: #{gnn_norm_bn.1} parent=1 // pred_region
      %312 = dma.done [#allocation3], 3072
    $region21: #{gnn_norm_bn.1} parent=1 // pred_fallthru
      _
    %313 = vsyncpa [#allocation3], 1

</llo_original>
